<compile_context>
chip_gen: v7x
topology: tpu7x:2x2x1
jax: 0.10.0
libtpu: 0.0.40
codegen_flags: <defaults>
</compile_context>

<pallas_src>
import functools

import jax
import jax.numpy as jnp
import numpy as np
from jax.experimental import pallas as pl
from jax.experimental.pallas import tpu as pltpu


# ----------------------------------------------------------------------------
# VMEM budgeting helpers (generation-aware: v5e/v6e 128 MiB, v7x 64 MiB per TC)
# ----------------------------------------------------------------------------
def _vmem_capacity_bytes():
    try:
        return int(pltpu.get_tpu_info().vmem_capacity_bytes)
    except Exception:
        return 64 << 20        # conservative fallback (v7x per-TensorCore VMEM)


def _kernel_b_vmem_bytes(rows, n_token, c_pair, num_head):
    """Rough per-grid-step live-set estimate for the attention kernel (f32)."""
    f4 = 4
    blk = rows * n_token * c_pair * f4
    est = 4 * blk                                         # pair in + out, double buffered
    est += 2 * rows * n_token * f4                        # mask rows, double buffered
    est += num_head * n_token * n_token * f4              # resident bias, single buffered
    est += (4 * c_pair * c_pair + c_pair * c_pair + 2 * c_pair) * f4   # weights + LN params
    est += 8 * blk                                        # xn, proj (4x), batched q/k/v
    est += 3 * rows * num_head * n_token * n_token * f4   # logits / exp / softmax weights
    est += 3 * blk                                        # attn, gated, out temporaries
    return est


def _choose_rows(n_token, c_pair, num_head, *, target_m=256):
    """Largest row batch R (divides N; R % 8 == 0 or R == N for the (8,128)
    block constraint) that reaches an MXU M dim >= target_m while the kernel-B
    live set fits the VMEM budget."""
    budget = int(0.6 * _vmem_capacity_bytes())
    cands = [r for r in range(1, n_token + 1)
             if n_token % r == 0 and (r % 8 == 0 or r == n_token)]
    best = cands[0]
    for r in cands:
        if _kernel_b_vmem_bytes(r, n_token, c_pair, num_head) > budget:
            break
        best = r
        if r * n_token >= target_m:
            break
    # TODO(synk): if even the smallest R exceeds the budget (huge N), the KV
    # axis must be tiled with an online softmax (see module docstring).
    return best


def _vmem_limit_bytes(rows, n_token, c_pair, num_head):
    cap = _vmem_capacity_bytes()
    need = _kernel_b_vmem_bytes(rows, n_token, c_pair, num_head)
    return int(min(0.9 * cap, max(32 << 20, 2 * need)))


def _const_spec(block_shape, index_map):
    """BlockSpec for blocks whose index_map never changes: single buffer."""
    try:
        return pl.BlockSpec(block_shape, index_map, pipeline_mode=pl.Buffered(1))
    except Exception:                       # older jax without pipeline_mode
        return pl.BlockSpec(block_shape, index_map)


# ----------------------------------------------------------------------------
# Kernel A: LayerNorm + pair-bias projection, emitted lane-dense as [H, N, N].
#           One (C, H)^T x (R*N, C)^T MXU matmul per grid step (no VPU/XLU
#           per-head sweeps); grid runs over batches of R rows of `pair`.
# ----------------------------------------------------------------------------
def ln_bias_kernel(pair_ref, gamma_ref, beta_ref, wb_ref, bias_ref, *,
                   num_head, rows, n_token, c_pair):
    x = pair_ref[...].reshape(rows * n_token, c_pair)
    mean = jnp.mean(x, axis=-1, keepdims=True)
    var = jnp.mean((x - mean) ** 2, axis=-1, keepdims=True)
    xn = (x - mean) * jax.lax.rsqrt(var + 1e-5)
    xn = xn * gamma_ref[...] + beta_ref[...]
    # (H, R*N) = wb^T @ xn^T, expressed with dimension_numbers so no operand
    # transpose is materialized.  Output is already head-major / lane-dense.
    b = jax.lax.dot_general(wb_ref[...], xn.astype(wb_ref.dtype),
                            dimension_numbers=(((0,), (1,)), ((), ())),
                            preferred_element_type=jnp.float32)
    bias_ref[...] = b.reshape(num_head, rows, n_token)


# ----------------------------------------------------------------------------
# Kernel B: fused LayerNorm + q|k|v|gate projection + head-batched attention +
#           gating + output projection for R batch rows per grid step.
# ----------------------------------------------------------------------------
def attention_kernel(pair_ref, mask_ref, bias_ref, gamma_ref, beta_ref,
                     wqkvg_ref, wo_ref, out_ref, *,
                     num_head, head_dim, rows, n_token, transpose):
    h, d, r, n = num_head, head_dim, rows, n_token
    c = h * d
    m = r * n
    mm_dtype = wqkvg_ref.dtype                       # f32 or bf16 MXU operands

    x2 = pair_ref[...].reshape(m, c)                 # (R,N,C) or (N,R,C) -> (M,C)

    # LayerNorm in f32 (VPU work, hidden under the MXU).
    mean = jnp.mean(x2, axis=-1, keepdims=True)
    var = jnp.mean((x2 - mean) ** 2, axis=-1, keepdims=True)
    xn = (x2 - mean) * jax.lax.rsqrt(var + 1e-5)
    xn = xn * gamma_ref[...] + beta_ref[...]

    # One fused (M, C) @ (C, 4C) projection: q | k | v | gate (f32 accumulation).
    proj = jnp.dot(xn.astype(mm_dtype), wqkvg_ref[...],
                   preferred_element_type=jnp.float32)
    gate = jax.nn.sigmoid(proj[:, 3 * c:4 * c])      # (M, C), f32, lane-aligned

    # Head-batched q/k/v with batch dim = (attention row, head).  For the
    # transpose path the block layout is (N, R, C); the axis swap is folded
    # into the permutation head-batching needs anyway (no extra swapaxes).
    if transpose:
        qkv_shape, perm, out_perm = (n, r, h, d), (1, 2, 0, 3), (2, 0, 1, 3)
    else:
        qkv_shape, perm, out_perm = (r, n, h, d), (0, 2, 1, 3), (0, 2, 1, 3)

    def to_batched(t):
        t = t.astype(mm_dtype).reshape(qkv_shape)
        return jnp.transpose(t, perm).reshape(r * h, n, d)

    scale = jnp.float32(head_dim ** -0.5)
    q = to_batched(proj[:, 0:c] * scale)
    k = to_batched(proj[:, c:2 * c])
    v = to_batched(proj[:, 2 * c:3 * c])

    logits = jnp.einsum('bnd,bmd->bnm', q, k,
                        preferred_element_type=jnp.float32)          # (R*H, N, N)
    logits = logits.reshape(r, h, n, n) + bias_ref[...][None]
    # Same semantics as torch masked_fill_ (replacement, not additive), so
    # fully-masked rows reduce to a uniform distribution like the reference.
    keep = (mask_ref[...] != 0.0)[:, None, None, :]                  # (R,1,1,N)
    logits = jnp.where(keep, logits, jnp.float32(-1e9))

    logits = logits - jnp.max(logits, axis=-1, keepdims=True)
    p = jnp.exp(logits)
    w = (p / jnp.sum(p, axis=-1, keepdims=True)).reshape(r * h, n, n)   # exact f32

    attn = jnp.einsum('bnm,bmd->bnd', w.astype(mm_dtype), v,
                      preferred_element_type=jnp.float32)            # (R*H, N, D)
    attn = jnp.transpose(attn.reshape(r, h, n, d), out_perm).reshape(m, c)

    out = jnp.dot((attn * gate).astype(mm_dtype), wo_ref[...],
                  preferred_element_type=jnp.float32)                # (M, C)
    out_ref[...] = out.reshape(out_ref.shape).astype(out_ref.dtype)


# ----------------------------------------------------------------------------
# Wrapper
# ----------------------------------------------------------------------------
def attention_pallas(pair, mask, params, *, num_head=4, transpose=False,
                     use_bf16_matmul=False):
    n_token, n2, c_pair = pair.shape
    assert n_token == n2 and c_pair % num_head == 0
    head_dim = c_pair // num_head
    gamma, beta, wb, wq, wk, wv, wg, wo = params

    w_dtype = jnp.bfloat16 if use_bf16_matmul else jnp.float32
    pair = pair.astype(jnp.float32)
    mask_f = mask.astype(jnp.float32)
    gamma2 = gamma.reshape(1, c_pair).astype(jnp.float32)
    beta2 = beta.reshape(1, c_pair).astype(jnp.float32)
    wqkvg = jnp.concatenate([wq, wk, wv, wg], axis=1).astype(w_dtype)   # (C, 4C)
    wb_w = wb.astype(w_dtype)                                           # (C, H)
    wo_w = wo.astype(w_dtype)                                           # (C, C)

    rows = _choose_rows(n_token, c_pair, num_head)
    grid = (n_token // rows,)
    cparams = pltpu.CompilerParams(
        dimension_semantics=("parallel",),
        vmem_limit_bytes=_vmem_limit_bytes(rows, n_token, c_pair, num_head))

    # --- Kernel A: LayerNorm + pair-bias projection -> [H, N, N] --------------
    bias = pl.pallas_call(
        functools.partial(ln_bias_kernel, num_head=num_head, rows=rows,
                          n_token=n_token, c_pair=c_pair),
        out_shape=jax.ShapeDtypeStruct((num_head, n_token, n_token), jnp.float32),
        grid_spec=pltpu.PrefetchScalarGridSpec(
            num_scalar_prefetch=0,
            grid=grid,
            in_specs=[
                pl.BlockSpec((rows, n_token, c_pair), lambda i: (i, 0, 0)),
                _const_spec((1, c_pair), lambda i: (0, 0)),
                _const_spec((1, c_pair), lambda i: (0, 0)),
                _const_spec((c_pair, num_head), lambda i: (0, 0)),
            ],
            out_specs=pl.BlockSpec((num_head, rows, n_token), lambda i: (0, i, 0)),
        ),
        compiler_params=cparams,
    )(pair, gamma2, beta2, wb_w)

    # --- Kernel B: fused LN + projections + attention + gating + output proj --
    if transpose:
        pair_spec = pl.BlockSpec((n_token, rows, c_pair), lambda i: (0, i, 0))
        out_spec = pl.BlockSpec((n_token, rows, c_pair), lambda i: (0, i, 0))
    else:
        pair_spec = pl.BlockSpec((rows, n_token, c_pair), lambda i: (i, 0, 0))
        out_spec = pl.BlockSpec((rows, n_token, c_pair), lambda i: (i, 0, 0))

    kernel_b = functools.partial(attention_kernel, num_head=num_head,
                                 head_dim=head_dim, rows=rows, n_token=n_token,
                                 transpose=transpose)
    out = pl.pallas_call(
        kernel_b,
        out_shape=jax.ShapeDtypeStruct((n_token, n_token, c_pair), jnp.float32),
        grid_spec=pltpu.PrefetchScalarGridSpec(
            num_scalar_prefetch=0,
            grid=grid,
            in_specs=[
                pair_spec,                                             # pair rows
                pl.BlockSpec((rows, n_token), lambda i: (i, 0)),       # mask rows
                _const_spec((num_head, n_token, n_token), lambda i: (0, 0, 0)),
                _const_spec((1, c_pair), lambda i: (0, 0)),            # LN gamma
                _const_spec((1, c_pair), lambda i: (0, 0)),            # LN beta
                _const_spec((c_pair, 4 * c_pair), lambda i: (0, 0)),   # q|k|v|gate W
                _const_spec((c_pair, c_pair), lambda i: (0, 0)),       # output W
            ],
            out_specs=out_spec,
        ),
        compiler_params=cparams,
    )(pair, mask_f, bias, gamma2, beta2, wqkvg, wo_w)
    return out


# ----------------------------------------------------------------------------
# Pure-JAX reference (mirrors the PyTorch forward exactly)
# ----------------------------------------------------------------------------
def attention_ref(pair, mask, params, *, num_head=4, transpose=False):
    N, _, C = pair.shape
    D = C // num_head
    gamma, beta, wb, wq, wk, wv, wg, wo = params
    mean = pair.mean(-1, keepdims=True)
    var = ((pair - mean) ** 2).mean(-1, keepdims=True)
    xn = (pair - mean) / jnp.sqrt(var + 1e-5) * gamma + beta
    bias = jnp.einsum('ijc,ch->hij', xn, wb)                    # [H, N, N]
    x = jnp.transpose(xn, (1, 0, 2)) if transpose else xn

    def split_heads(t):                                         # b n (h d) -> b h n d
        return jnp.transpose(t.reshape(N, N, num_head, D), (0, 2, 1, 3))

    q = split_heads(x @ wq) * (D ** -0.5)
    k = split_heads(x @ wk)
    v = split_heads(x @ wv)
    logits = jnp.einsum('bhnd,bhmd->bhnm', q, k) + bias[None]
    m = (mask != 0)[:, None, None, :]
    logits = jnp.where(m, logits, -1e9)
    w = jax.nn.softmax(logits, axis=-1)
    wa = jnp.einsum('bhnm,bhmd->bhnd', w, v)
    wa = jnp.transpose(wa, (0, 2, 1, 3)).reshape(N, N, C)
    gate = jax.nn.sigmoid(x @ wg)
    out = (wa * gate) @ wo
    if transpose:
        out = jnp.transpose(out, (1, 0, 2))
    return out


if __name__ == "__main__":
    N_TOKEN = 16
    C_PAIR = 128
    NUM_HEAD = 4

    key = jax.random.PRNGKey(0)
    keys = jax.random.split(key, 10)

    pair = jax.random.normal(keys[0], (N_TOKEN, N_TOKEN, C_PAIR), dtype=jnp.float32)
    mask = (jax.random.uniform(keys[1], (N_TOKEN, N_TOKEN)) < 0.8).astype(jnp.float32)

    scale = 1.0 / np.sqrt(C_PAIR)
    params = (
        1.0 + 0.1 * jax.random.normal(keys[2], (C_PAIR,), jnp.float32),        # LN gamma
        0.1 * jax.random.normal(keys[3], (C_PAIR,), jnp.float32),              # LN beta
        scale * jax.random.normal(keys[4], (C_PAIR, NUM_HEAD), jnp.float32),   # pair_bias W
        scale * jax.random.normal(keys[5], (C_PAIR, C_PAIR), jnp.float32),     # q W
        scale * jax.random.normal(keys[6], (C_PAIR, C_PAIR), jnp.float32),     # k W
        scale * jax.random.normal(keys[7], (C_PAIR, C_PAIR), jnp.float32),     # v W
        scale * jax.random.normal(keys[8], (C_PAIR, C_PAIR), jnp.float32),     # gating W
        scale * jax.random.normal(keys[9], (C_PAIR, C_PAIR), jnp.float32),     # output W
    )

    for transpose in (False, True):
        ref = attention_ref(pair, mask, params, num_head=NUM_HEAD,
                            transpose=transpose)

        # f32 path: residual differences come from TPU default-precision matmul
        # passes with different contraction orders on the two sides.
        out = attention_pallas(pair, mask, params, num_head=NUM_HEAD,
                               transpose=transpose)
        out = jax.block_until_ready(out)
        np.testing.assert_allclose(np.asarray(out), np.asarray(ref),
                                   rtol=1e-2, atol=1e-2)

        # bf16 MXU-operand path (perf mode): ~8-bit mantissa on matmul inputs,
        # f32 accumulation and f32 softmax -> relaxed tolerance.
        out_bf16 = attention_pallas(pair, mask, params, num_head=NUM_HEAD,
                                    transpose=transpose, use_bf16_matmul=True)
        out_bf16 = jax.block_until_ready(out_bf16)
        np.testing.assert_allclose(np.asarray(out_bf16), np.asarray(ref),
                                   rtol=5e-2, atol=5e-2)

    print("KERNEL_OK")
</pallas_src>

<mosaic_0001>
module attributes {stable_mosaic.version = 11 : i64} {
  func.func @ln_bias_kernel(%arg0: i32, %arg1: memref<16x16x128xf32, #tpu.memory_space<vmem>>, %arg2: memref<1x128xf32, #tpu.memory_space<vmem>>, %arg3: memref<1x128xf32, #tpu.memory_space<vmem>>, %arg4: memref<128x4xf32, #tpu.memory_space<vmem>>, %arg5: memref<4x16x16xf32, #tpu.memory_space<vmem>>) attributes {dimension_semantics = [#tpu.dimension_semantics<parallel>], iteration_bounds = array<i64: 1>, scalar_prefetch = 0 : i64, scratch_operands = 0 : i64, tpu.core_type = #tpu.core_type<tc>, window_params = [{transform_indices = @transform_0, window_bounds = array<i64: 16, 16, 128>}, {pipeline_mode = #tpu.pipeline_mode<synchronous>, transform_indices = @transform_1, window_bounds = array<i64: 1, 128>}, {pipeline_mode = #tpu.pipeline_mode<synchronous>, transform_indices = @transform_2, window_bounds = array<i64: 1, 128>}, {pipeline_mode = #tpu.pipeline_mode<synchronous>, transform_indices = @transform_3, window_bounds = array<i64: 128, 4>}, {transform_indices = @transform_4, window_bounds = array<i64: 4, 16, 16>}]} {
    %c0 = arith.constant 0 : index
    %c0_0 = arith.constant 0 : index
    %c0_1 = arith.constant 0 : index
    %0 = vector.load %arg1[%c0, %c0_0, %c0_1] : memref<16x16x128xf32, #tpu.memory_space<vmem>>, vector<16x16x128xf32>
    %1 = vector.shape_cast %0 : vector<16x16x128xf32> to vector<256x128xf32>
    %cst = arith.constant dense<0.000000e+00> : vector<256xf32>
    %2 = vector.multi_reduction <add>, %1, %cst [1] : vector<256x128xf32> to vector<256xf32>
    %3 = vector.shape_cast %2 : vector<256xf32> to vector<256x1xf32>
    %cst_2 = arith.constant 1.280000e+02 : f32
    %4 = vector.broadcast %cst_2 : f32 to vector<256x1xf32>
    %5 = arith.divf %3, %4 : vector<256x1xf32>
    %6 = vector.broadcast %5 : vector<256x1xf32> to vector<256x128xf32>
    %7 = arith.subf %1, %6 : vector<256x128xf32>
    %8 = arith.mulf %7, %7 : vector<256x128xf32>
    %cst_3 = arith.constant dense<0.000000e+00> : vector<256xf32>
    %9 = vector.multi_reduction <add>, %8, %cst_3 [1] : vector<256x128xf32> to vector<256xf32>
    %10 = vector.shape_cast %9 : vector<256xf32> to vector<256x1xf32>
    %cst_4 = arith.constant 1.280000e+02 : f32
    %11 = vector.broadcast %cst_4 : f32 to vector<256x1xf32>
    %12 = arith.divf %10, %11 : vector<256x1xf32>
    %13 = vector.broadcast %5 : vector<256x1xf32> to vector<256x128xf32>
    %14 = arith.subf %1, %13 : vector<256x128xf32>
    %cst_5 = arith.constant 9.99999974E-6 : f32
    %15 = vector.broadcast %cst_5 : f32 to vector<256x1xf32>
    %16 = arith.addf %12, %15 : vector<256x1xf32>
    %17 = math.rsqrt %16 : vector<256x1xf32>
    %18 = vector.broadcast %17 : vector<256x1xf32> to vector<256x128xf32>
    %19 = arith.mulf %14, %18 : vector<256x128xf32>
    %c0_6 = arith.constant 0 : index
    %c0_7 = arith.constant 0 : index
    %20 = vector.load %arg2[%c0_6, %c0_7] : memref<1x128xf32, #tpu.memory_space<vmem>>, vector<1x128xf32>
    %21 = vector.broadcast %20 : vector<1x128xf32> to vector<256x128xf32>
    %22 = arith.mulf %19, %21 : vector<256x128xf32>
    %c0_8 = arith.constant 0 : index
    %c0_9 = arith.constant 0 : index
    %23 = vector.load %arg3[%c0_8, %c0_9] : memref<1x128xf32, #tpu.memory_space<vmem>>, vector<1x128xf32>
    %24 = vector.broadcast %23 : vector<1x128xf32> to vector<256x128xf32>
    %25 = arith.addf %22, %24 : vector<256x128xf32>
    %c0_10 = arith.constant 0 : index
    %c0_11 = arith.constant 0 : index
    %26 = vector.load %arg4[%c0_10, %c0_11] : memref<128x4xf32, #tpu.memory_space<vmem>>, vector<128x4xf32>
    %cst_12 = arith.constant dense<0.000000e+00> : vector<4x256xf32>
    %27 = tpu.matmul %26, %25, %cst_12 {dimension_numbers = #tpu.dot_dimension_numbers<[0], [1], [1], [0], [0, 1, 1, 0], [], []>} : vector<128x4xf32>, vector<256x128xf32>, vector<4x256xf32> -> vector<4x256xf32>
    %28 = vector.shape_cast %27 : vector<4x256xf32> to vector<4x16x16xf32>
    %c0_13 = arith.constant 0 : index
    %c0_14 = arith.constant 0 : index
    %c0_15 = arith.constant 0 : index
    %29 = vector.load %arg5[%c0_13, %c0_14, %c0_15] : memref<4x16x16xf32, #tpu.memory_space<vmem>>, vector<4x16x16xf32>
    tpu.vector_store %arg5[%c0_13, %c0_14, %c0_15], %28 {strides = array<i32>} : memref<4x16x16xf32, #tpu.memory_space<vmem>>, vector<4x16x16xf32>,
    return
  }
  func.func @transform_0(%arg0: i32) -> (i32, i32, i32) {
    %c0_i32 = arith.constant 0 : i32
    %c0_i32_0 = arith.constant 0 : i32
    %c0_i32_1 = arith.constant 0 : i32
    return %arg0, %c0_i32, %c0_i32_0 : i32, i32, i32
  }
  func.func @transform_1(%arg0: i32) -> (i32, i32) {
    %c0_i32 = arith.constant 0 : i32
    %c0_i32_0 = arith.constant 0 : i32
    %c0_i32_1 = arith.constant 0 : i32
    return %c0_i32, %c0_i32_0 : i32, i32
  }
  func.func @transform_2(%arg0: i32) -> (i32, i32) {
    %c0_i32 = arith.constant 0 : i32
    %c0_i32_0 = arith.constant 0 : i32
    %c0_i32_1 = arith.constant 0 : i32
    return %c0_i32, %c0_i32_0 : i32, i32
  }
  func.func @transform_3(%arg0: i32) -> (i32, i32) {
    %c0_i32 = arith.constant 0 : i32
    %c0_i32_0 = arith.constant 0 : i32
    %c0_i32_1 = arith.constant 0 : i32
    return %c0_i32, %c0_i32_0 : i32, i32
  }
  func.func @transform_4(%arg0: i32) -> (i32, i32, i32) {
    %c0_i32 = arith.constant 0 : i32
    %c0_i32_0 = arith.constant 0 : i32
    %c0_i32_1 = arith.constant 0 : i32
    return %c0_i32, %arg0, %c0_i32_0 : i32, i32, i32
  }
}

</mosaic_0001>

<llo_original>
// kernel: tpu_custom_call.1
$region0: #{tpu_custom_call.1}
  #allocation0 [shape = 'u32[]', space=smem, size = 0x4, offset = 0x4, fixed_abs, tag = 'smem constant byte address 0x4 - core index']
  #allocation1 [shape = 'u32[144,128]{1,0:T(1,128)}', space=vmem, size = 0x12000, scoped, tag = 'internal scratch']
  %s0 = inlined_call_operand.hbm [shape: f32[16,16,128], index: 0, kind: input, shape index: {}]
  %s1 = inlined_call_operand.vmem [shape: f32[1,128], index: 1, kind: input, shape index: {}]
  %s2 = inlined_call_operand.vmem [shape: f32[1,128], index: 2, kind: input, shape index: {}]
  %s3 = inlined_call_operand.vmem [shape: f32[128,4], index: 3, kind: input, shape index: {}]
  %s4 = inlined_call_operand.hbm [shape: f32[4,16,16], index: 4, kind: output, shape index: {}]
  %s5 = sld [smem:[#allocation0]]
  $region30: #{tpu_custom_call.1} parent=0
    _
  %s7 = ssub.s32 1, %s5
  %s8 = scalar_select 0, %s7, %s5
  $region1: #{tpu_custom_call.1} parent=0
    #allocation2 [shape = 'u8[131072]{0}', space=vmem, size = 0x20000, scoped, tag = 'input window, operand 0, single buffered']
    #allocation3 [shape = 's32[1]{0}', space=sflag, size = 0x4, scoped, tag = 'scoped memory for tpu_custom_call.1']
    #allocation4 [shape = 's32[1]{0}', space=sflag, size = 0x4, scoped, tag = 'scoped memory for tpu_custom_call.1']
    #allocation5 [shape = 'u8[32768]{0}', space=vmem, size = 0x8000, scoped, tag = 'output window, operand 0, single buffered']
    %9 = vsyncpa [#allocation3], 0
    %10 = vsyncpa [#allocation4], 0
    // Predicated region
    $region2: #{tpu_custom_call.1} parent=1 // pred_check
      _
    $region3: #{tpu_custom_call.1} parent=1 // pred_check_branch
      %12 = sbr.rel (0) target = $region5
    $region4: #{tpu_custom_call.1} parent=1 // pred_region
      %s14 = ssub.s32 4096, 4096
      %15 = vsyncadd [#allocation3], %s14
      %s16 = sshll.u32 [#allocation2], 4
      %s17 = int_to_ptr.vmem [resolvable:$true] %s16
      %22 = dma.hbm_to_vmem [thread:$0]  %s0, 4096, %s17, [#allocation3], 128, 128, 8
    $region5: #{tpu_custom_call.1} parent=1 // pred_fallthru
      _
    // Predicated region
    $region6: #{tpu_custom_call.1} parent=1 // pred_check
      _
    $region7: #{tpu_custom_call.1} parent=1 // pred_check_branch
      %24 = sbr.rel (0) target = $region9
    $region8: #{tpu_custom_call.1} parent=1 // pred_region
      _
    $region9: #{tpu_custom_call.1} parent=1 // pred_fallthru
      _
    // Predicated region
    $region10: #{tpu_custom_call.1} parent=1 // pred_check
      _
    $region11: #{tpu_custom_call.1} parent=1 // pred_check_branch
      %26 = sbr.rel (0) target = $region13
    $region12: #{tpu_custom_call.1} parent=1 // pred_region
      _
    $region13: #{tpu_custom_call.1} parent=1 // pred_fallthru
      _
    // Predicated region
    $region14: #{tpu_custom_call.1} parent=1 // pred_check
      _
    $region15: #{tpu_custom_call.1} parent=1 // pred_check_branch
      %28 = sbr.rel (0) target = $region17
    $region16: #{tpu_custom_call.1} parent=1 // pred_region
      _
    $region17: #{tpu_custom_call.1} parent=1 // pred_fallthru
      _
    // Predicated region
    $region18: #{tpu_custom_call.1} parent=1 // pred_check
      _
    $region19: #{tpu_custom_call.1} parent=1 // pred_check_branch
      %30 = sbr.rel (0) target = $region21
    $region20: #{tpu_custom_call.1} parent=1 // pred_region
      %31 = dma.done [#allocation3], 4096
    $region21: #{tpu_custom_call.1} parent=1 // pred_fallthru
      _
    %v32 = vld [vmem:[#allocation2] sm:$0xff]
    %v33 = vld [vmem:[#allocation2 + $0x8] sm:$0xff]
    %v34 = vld [vmem:[#allocation2 + $0x10] sm:$0xff]
    %v35 = vld [vmem:[#allocation2 + $0x18] sm:$0xff]
    %v36 = vld [vmem:[#allocation2 + $0x20] sm:$0xff]
    %v37 = vld [vmem:[#allocation2 + $0x28] sm:$0xff]
    %v38 = vld [vmem:[#allocation2 + $0x30] sm:$0xff]
    %v39 = vld [vmem:[#allocation2 + $0x38] sm:$0xff]
    %v40 = vld [vmem:[#allocation2 + $0x40] sm:$0xff]
    %v41 = vld [vmem:[#allocation2 + $0x48] sm:$0xff]
    %v42 = vld [vmem:[#allocation2 + $0x50] sm:$0xff]
    %v43 = vld [vmem:[#allocation2 + $0x58] sm:$0xff]
    %v44 = vld [vmem:[#allocation2 + $0x60] sm:$0xff]
    %v45 = vld [vmem:[#allocation2 + $0x68] sm:$0xff]
    %v46 = vld [vmem:[#allocation2 + $0x70] sm:$0xff]
    %v47 = vld [vmem:[#allocation2 + $0x78] sm:$0xff]
    %v48 = vld [vmem:[#allocation2 + $0x80] sm:$0xff]
    %v49 = vld [vmem:[#allocation2 + $0x88] sm:$0xff]
    %v50 = vld [vmem:[#allocation2 + $0x90] sm:$0xff]
    %v51 = vld [vmem:[#allocation2 + $0x98] sm:$0xff]
    %v52 = vld [vmem:[#allocation2 + $0xa0] sm:$0xff]
    %v53 = vld [vmem:[#allocation2 + $0xa8] sm:$0xff]
    %v54 = vld [vmem:[#allocation2 + $0xb0] sm:$0xff]
    %v55 = vld [vmem:[#allocation2 + $0xb8] sm:$0xff]
    %v56 = vld [vmem:[#allocation2 + $0xc0] sm:$0xff]
    %v57 = vld [vmem:[#allocation2 + $0xc8] sm:$0xff]
    %v58 = vld [vmem:[#allocation2 + $0xd0] sm:$0xff]
    %v59 = vld [vmem:[#allocation2 + $0xd8] sm:$0xff]
    %v60 = vld [vmem:[#allocation2 + $0xe0] sm:$0xff]
    %v61 = vld [vmem:[#allocation2 + $0xe8] sm:$0xff]
    %v62 = vld [vmem:[#allocation2 + $0xf0] sm:$0xff]
    %v63 = vld [vmem:[#allocation2 + $0xf8] sm:$0xff]
    %64 = vadd.xlane.f32.xlu0 %v32
    %v65 = vpop.xlane.xlu0 %64
    %66 = vadd.xlane.f32.xlu0 %v33
    %v67 = vpop.xlane.xlu0 %66
    %68 = vadd.xlane.f32.xlu0 %v34
    %v69 = vpop.xlane.xlu0 %68
    %70 = vadd.xlane.f32.xlu0 %v35
    %v71 = vpop.xlane.xlu0 %70
    %72 = vadd.xlane.f32.xlu0 %v36
    %v73 = vpop.xlane.xlu0 %72
    %74 = vadd.xlane.f32.xlu0 %v37
    %v75 = vpop.xlane.xlu0 %74
    %76 = vadd.xlane.f32.xlu0 %v38
    %v77 = vpop.xlane.xlu0 %76
    %78 = vadd.xlane.f32.xlu0 %v39
    %v79 = vpop.xlane.xlu0 %78
    %80 = vadd.xlane.f32.xlu0 %v40
    %v81 = vpop.xlane.xlu0 %80
    %82 = vadd.xlane.f32.xlu0 %v41
    %v83 = vpop.xlane.xlu0 %82
    %84 = vadd.xlane.f32.xlu0 %v42
    %v85 = vpop.xlane.xlu0 %84
    %86 = vadd.xlane.f32.xlu0 %v43
    %v87 = vpop.xlane.xlu0 %86
    %88 = vadd.xlane.f32.xlu0 %v44
    %v89 = vpop.xlane.xlu0 %88
    %90 = vadd.xlane.f32.xlu0 %v45
    %v91 = vpop.xlane.xlu0 %90
    %92 = vadd.xlane.f32.xlu0 %v46
    %v93 = vpop.xlane.xlu0 %92
    %94 = vadd.xlane.f32.xlu0 %v47
    %v95 = vpop.xlane.xlu0 %94
    %96 = vadd.xlane.f32.xlu0 %v48
    %v97 = vpop.xlane.xlu0 %96
    %98 = vadd.xlane.f32.xlu0 %v49
    %v99 = vpop.xlane.xlu0 %98
    %100 = vadd.xlane.f32.xlu0 %v50
    %v101 = vpop.xlane.xlu0 %100
    %102 = vadd.xlane.f32.xlu0 %v51
    %v103 = vpop.xlane.xlu0 %102
    %104 = vadd.xlane.f32.xlu0 %v52
    %v105 = vpop.xlane.xlu0 %104
    %106 = vadd.xlane.f32.xlu0 %v53
    %v107 = vpop.xlane.xlu0 %106
    %108 = vadd.xlane.f32.xlu0 %v54
    %v109 = vpop.xlane.xlu0 %108
    %110 = vadd.xlane.f32.xlu0 %v55
    %v111 = vpop.xlane.xlu0 %110
    %112 = vadd.xlane.f32.xlu0 %v56
    %v113 = vpop.xlane.xlu0 %112
    %114 = vadd.xlane.f32.xlu0 %v57
    %v115 = vpop.xlane.xlu0 %114
    %116 = vadd.xlane.f32.xlu0 %v58
    %v117 = vpop.xlane.xlu0 %116
    %118 = vadd.xlane.f32.xlu0 %v59
    %v119 = vpop.xlane.xlu0 %118
    %120 = vadd.xlane.f32.xlu0 %v60
    %v121 = vpop.xlane.xlu0 %120
    %122 = vadd.xlane.f32.xlu0 %v61
    %v123 = vpop.xlane.xlu0 %122
    %124 = vadd.xlane.f32.xlu0 %v62
    %v125 = vpop.xlane.xlu0 %124
    %126 = vadd.xlane.f32.xlu0 %v63
    %v127 = vpop.xlane.xlu0 %126
    %v128 = vrcp.pop 128.0
    %v129 = vmul.f32 %v65, %v128
    %v130 = vmul.f32 %v67, %v128
    %v131 = vmul.f32 %v69, %v128
    %v132 = vmul.f32 %v71, %v128
    %v133 = vmul.f32 %v73, %v128
    %v134 = vmul.f32 %v75, %v128
    %v135 = vmul.f32 %v77, %v128
    %v136 = vmul.f32 %v79, %v128
    %v137 = vmul.f32 %v81, %v128
    %v138 = vmul.f32 %v83, %v128
    %v139 = vmul.f32 %v85, %v128
    %v140 = vmul.f32 %v87, %v128
    %v141 = vmul.f32 %v89, %v128
    %v142 = vmul.f32 %v91, %v128
    %v143 = vmul.f32 %v93, %v128
    %v144 = vmul.f32 %v95, %v128
    %v145 = vmul.f32 %v97, %v128
    %v146 = vmul.f32 %v99, %v128
    %v147 = vmul.f32 %v101, %v128
    %v148 = vmul.f32 %v103, %v128
    %v149 = vmul.f32 %v105, %v128
    %v150 = vmul.f32 %v107, %v128
    %v151 = vmul.f32 %v109, %v128
    %v152 = vmul.f32 %v111, %v128
    %v153 = vmul.f32 %v113, %v128
    %v154 = vmul.f32 %v115, %v128
    %v155 = vmul.f32 %v117, %v128
    %v156 = vmul.f32 %v119, %v128
    %v157 = vmul.f32 %v121, %v128
    %v158 = vmul.f32 %v123, %v128
    %v159 = vmul.f32 %v125, %v128
    %v160 = vmul.f32 %v127, %v128
    %v161 = vsub.f32 %v32, %v129
    %v162 = vsub.f32 %v33, %v130
    %v163 = vsub.f32 %v34, %v131
    %v164 = vsub.f32 %v35, %v132
    %v165 = vsub.f32 %v36, %v133
    %v166 = vsub.f32 %v37, %v134
    %v167 = vsub.f32 %v38, %v135
    %v168 = vsub.f32 %v39, %v136
    %v169 = vsub.f32 %v40, %v137
    %v170 = vsub.f32 %v41, %v138
    %v171 = vsub.f32 %v42, %v139
    %v172 = vsub.f32 %v43, %v140
    %v173 = vsub.f32 %v44, %v141
    %v174 = vsub.f32 %v45, %v142
    %v175 = vsub.f32 %v46, %v143
    %v176 = vsub.f32 %v47, %v144
    %v177 = vsub.f32 %v48, %v145
    %v178 = vsub.f32 %v49, %v146
    %v179 = vsub.f32 %v50, %v147
    %v180 = vsub.f32 %v51, %v148
    %v181 = vsub.f32 %v52, %v149
    %v182 = vsub.f32 %v53, %v150
    %v183 = vsub.f32 %v54, %v151
    %v184 = vsub.f32 %v55, %v152
    %v185 = vsub.f32 %v56, %v153
    %v186 = vsub.f32 %v57, %v154
    %v187 = vsub.f32 %v58, %v155
    %v188 = vsub.f32 %v59, %v156
    %v189 = vsub.f32 %v60, %v157
    %v190 = vsub.f32 %v61, %v158
    %v191 = vsub.f32 %v62, %v159
    %v192 = vsub.f32 %v63, %v160
    %v193 = vmul.f32 %v161, %v161
    %v194 = vmul.f32 %v162, %v162
    %v195 = vmul.f32 %v163, %v163
    %v196 = vmul.f32 %v164, %v164
    %v197 = vmul.f32 %v165, %v165
    %v198 = vmul.f32 %v166, %v166
    %v199 = vmul.f32 %v167, %v167
    %v200 = vmul.f32 %v168, %v168
    %v201 = vmul.f32 %v169, %v169
    %v202 = vmul.f32 %v170, %v170
    %v203 = vmul.f32 %v171, %v171
    %v204 = vmul.f32 %v172, %v172
    %v205 = vmul.f32 %v173, %v173
    %v206 = vmul.f32 %v174, %v174
    %v207 = vmul.f32 %v175, %v175
    %v208 = vmul.f32 %v176, %v176
    %v209 = vmul.f32 %v177, %v177
    %v210 = vmul.f32 %v178, %v178
    %v211 = vmul.f32 %v179, %v179
    %v212 = vmul.f32 %v180, %v180
    %v213 = vmul.f32 %v181, %v181
    %v214 = vmul.f32 %v182, %v182
    %v215 = vmul.f32 %v183, %v183
    %v216 = vmul.f32 %v184, %v184
    %v217 = vmul.f32 %v185, %v185
    %v218 = vmul.f32 %v186, %v186
    %v219 = vmul.f32 %v187, %v187
    %v220 = vmul.f32 %v188, %v188
    %v221 = vmul.f32 %v189, %v189
    %v222 = vmul.f32 %v190, %v190
    %v223 = vmul.f32 %v191, %v191
    %v224 = vmul.f32 %v192, %v192
    %225 = vadd.xlane.f32.xlu0 %v193
    %v226 = vpop.xlane.xlu0 %225
    %227 = vadd.xlane.f32.xlu0 %v194
    %v228 = vpop.xlane.xlu0 %227
    %229 = vadd.xlane.f32.xlu0 %v195
    %v230 = vpop.xlane.xlu0 %229
    %231 = vadd.xlane.f32.xlu0 %v196
    %v232 = vpop.xlane.xlu0 %231
    %233 = vadd.xlane.f32.xlu0 %v197
    %v234 = vpop.xlane.xlu0 %233
    %235 = vadd.xlane.f32.xlu0 %v198
    %v236 = vpop.xlane.xlu0 %235
    %237 = vadd.xlane.f32.xlu0 %v199
    %v238 = vpop.xlane.xlu0 %237
    %239 = vadd.xlane.f32.xlu0 %v200
    %v240 = vpop.xlane.xlu0 %239
    %241 = vadd.xlane.f32.xlu0 %v201
    %v242 = vpop.xlane.xlu0 %241
    %243 = vadd.xlane.f32.xlu0 %v202
    %v244 = vpop.xlane.xlu0 %243
    %245 = vadd.xlane.f32.xlu0 %v203
    %v246 = vpop.xlane.xlu0 %245
    %247 = vadd.xlane.f32.xlu0 %v204
    %v248 = vpop.xlane.xlu0 %247
    %249 = vadd.xlane.f32.xlu0 %v205
    %v250 = vpop.xlane.xlu0 %249
    %251 = vadd.xlane.f32.xlu0 %v206
    %v252 = vpop.xlane.xlu0 %251
    %253 = vadd.xlane.f32.xlu0 %v207
    %v254 = vpop.xlane.xlu0 %253
    %255 = vadd.xlane.f32.xlu0 %v208
    %v256 = vpop.xlane.xlu0 %255
    %257 = vadd.xlane.f32.xlu0 %v209
    %v258 = vpop.xlane.xlu0 %257
    %259 = vadd.xlane.f32.xlu0 %v210
    %v260 = vpop.xlane.xlu0 %259
    %261 = vadd.xlane.f32.xlu0 %v211
    %v262 = vpop.xlane.xlu0 %261
    %263 = vadd.xlane.f32.xlu0 %v212
    %v264 = vpop.xlane.xlu0 %263
    %265 = vadd.xlane.f32.xlu0 %v213
    %v266 = vpop.xlane.xlu0 %265
    %267 = vadd.xlane.f32.xlu0 %v214
    %v268 = vpop.xlane.xlu0 %267
    %269 = vadd.xlane.f32.xlu0 %v215
    %v270 = vpop.xlane.xlu0 %269
    %271 = vadd.xlane.f32.xlu0 %v216
    %v272 = vpop.xlane.xlu0 %271
    %273 = vadd.xlane.f32.xlu0 %v217
    %v274 = vpop.xlane.xlu0 %273
    %275 = vadd.xlane.f32.xlu0 %v218
    %v276 = vpop.xlane.xlu0 %275
    %277 = vadd.xlane.f32.xlu0 %v219
    %v278 = vpop.xlane.xlu0 %277
    %279 = vadd.xlane.f32.xlu0 %v220
    %v280 = vpop.xlane.xlu0 %279
    %281 = vadd.xlane.f32.xlu0 %v221
    %v282 = vpop.xlane.xlu0 %281
    %283 = vadd.xlane.f32.xlu0 %v222
    %v284 = vpop.xlane.xlu0 %283
    %285 = vadd.xlane.f32.xlu0 %v223
    %v286 = vpop.xlane.xlu0 %285
    %287 = vadd.xlane.f32.xlu0 %v224
    %v288 = vpop.xlane.xlu0 %287
    %v289 = vmul.f32 %v226, %v128
    %v290 = vmul.f32 %v228, %v128
    %v291 = vmul.f32 %v230, %v128
    %v292 = vmul.f32 %v232, %v128
    %v293 = vmul.f32 %v234, %v128
    %v294 = vmul.f32 %v236, %v128
    %v295 = vmul.f32 %v238, %v128
    %v296 = vmul.f32 %v240, %v128
    %v297 = vmul.f32 %v242, %v128
    %v298 = vmul.f32 %v244, %v128
    %v299 = vmul.f32 %v246, %v128
    %v300 = vmul.f32 %v248, %v128
    %v301 = vmul.f32 %v250, %v128
    %v302 = vmul.f32 %v252, %v128
    %v303 = vmul.f32 %v254, %v128
    %v304 = vmul.f32 %v256, %v128
    %v305 = vmul.f32 %v258, %v128
    %v306 = vmul.f32 %v260, %v128
    %v307 = vmul.f32 %v262, %v128
    %v308 = vmul.f32 %v264, %v128
    %v309 = vmul.f32 %v266, %v128
    %v310 = vmul.f32 %v268, %v128
    %v311 = vmul.f32 %v270, %v128
    %v312 = vmul.f32 %v272, %v128
    %v313 = vmul.f32 %v274, %v128
    %v314 = vmul.f32 %v276, %v128
    %v315 = vmul.f32 %v278, %v128
    %v316 = vmul.f32 %v280, %v128
    %v317 = vmul.f32 %v282, %v128
    %v318 = vmul.f32 %v284, %v128
    %v319 = vmul.f32 %v286, %v128
    %v320 = vmul.f32 %v288, %v128
    %v321 = vadd.f32 %v289, 1e-05
    %v322 = vadd.f32 %v290, 1e-05
    %v323 = vadd.f32 %v291, 1e-05
    %v324 = vadd.f32 %v292, 1e-05
    %v325 = vadd.f32 %v293, 1e-05
    %v326 = vadd.f32 %v294, 1e-05
    %v327 = vadd.f32 %v295, 1e-05
    %v328 = vadd.f32 %v296, 1e-05
    %v329 = vadd.f32 %v297, 1e-05
    %v330 = vadd.f32 %v298, 1e-05
    %v331 = vadd.f32 %v299, 1e-05
    %v332 = vadd.f32 %v300, 1e-05
    %v333 = vadd.f32 %v301, 1e-05
    %v334 = vadd.f32 %v302, 1e-05
    %v335 = vadd.f32 %v303, 1e-05
    %v336 = vadd.f32 %v304, 1e-05
    %v337 = vadd.f32 %v305, 1e-05
    %v338 = vadd.f32 %v306, 1e-05
    %v339 = vadd.f32 %v307, 1e-05
    %v340 = vadd.f32 %v308, 1e-05
    %v341 = vadd.f32 %v309, 1e-05
    %v342 = vadd.f32 %v310, 1e-05
    %v343 = vadd.f32 %v311, 1e-05
    %v344 = vadd.f32 %v312, 1e-05
    %v345 = vadd.f32 %v313, 1e-05
    %v346 = vadd.f32 %v314, 1e-05
    %v347 = vadd.f32 %v315, 1e-05
    %v348 = vadd.f32 %v316, 1e-05
    %v349 = vadd.f32 %v317, 1e-05
    %v350 = vadd.f32 %v318, 1e-05
    %v351 = vadd.f32 %v319, 1e-05
    %v352 = vadd.f32 %v320, 1e-05
    %v353 = vrsqrt.pop %v321
    %v354 = vrsqrt.pop %v322
    %v355 = vrsqrt.pop %v323
    %v356 = vrsqrt.pop %v324
    %v357 = vrsqrt.pop %v325
    %v358 = vrsqrt.pop %v326
    %v359 = vrsqrt.pop %v327
    %v360 = vrsqrt.pop %v328
    %v361 = vrsqrt.pop %v329
    %v362 = vrsqrt.pop %v330
    %v363 = vrsqrt.pop %v331
    %v364 = vrsqrt.pop %v332
    %v365 = vrsqrt.pop %v333
    %v366 = vrsqrt.pop %v334
    %v367 = vrsqrt.pop %v335
    %v368 = vrsqrt.pop %v336
    %v369 = vrsqrt.pop %v337
    %v370 = vrsqrt.pop %v338
    %v371 = vrsqrt.pop %v339
    %v372 = vrsqrt.pop %v340
    %v373 = vrsqrt.pop %v341
    %v374 = vrsqrt.pop %v342
    %v375 = vrsqrt.pop %v343
    %v376 = vrsqrt.pop %v344
    %v377 = vrsqrt.pop %v345
    %v378 = vrsqrt.pop %v346
    %v379 = vrsqrt.pop %v347
    %v380 = vrsqrt.pop %v348
    %v381 = vrsqrt.pop %v349
    %v382 = vrsqrt.pop %v350
    %v383 = vrsqrt.pop %v351
    %v384 = vrsqrt.pop %v352
    %v385 = vmul.f32 %v161, %v353
    %v386 = vmul.f32 %v162, %v354
    %v387 = vmul.f32 %v163, %v355
    %v388 = vmul.f32 %v164, %v356
    %v389 = vmul.f32 %v165, %v357
    %v390 = vmul.f32 %v166, %v358
    %v391 = vmul.f32 %v167, %v359
    %v392 = vmul.f32 %v168, %v360
    %v393 = vmul.f32 %v169, %v361
    %v394 = vmul.f32 %v170, %v362
    %v395 = vmul.f32 %v171, %v363
    %v396 = vmul.f32 %v172, %v364
    %v397 = vmul.f32 %v173, %v365
    %v398 = vmul.f32 %v174, %v366
    %v399 = vmul.f32 %v175, %v367
    %v400 = vmul.f32 %v176, %v368
    %v401 = vmul.f32 %v177, %v369
    %v402 = vmul.f32 %v178, %v370
    %v403 = vmul.f32 %v179, %v371
    %v404 = vmul.f32 %v180, %v372
    %v405 = vmul.f32 %v181, %v373
    %v406 = vmul.f32 %v182, %v374
    %v407 = vmul.f32 %v183, %v375
    %v408 = vmul.f32 %v184, %v376
    %v409 = vmul.f32 %v185, %v377
    %v410 = vmul.f32 %v186, %v378
    %v411 = vmul.f32 %v187, %v379
    %v412 = vmul.f32 %v188, %v380
    %v413 = vmul.f32 %v189, %v381
    %v414 = vmul.f32 %v190, %v382
    %v415 = vmul.f32 %v191, %v383
    %v416 = vmul.f32 %v192, %v384
    %v417 = vld [vmem:[%s1] sm:$0x1]
    %v419 = vlaneseq
    %v420 = vshrl.u32 %v419, 7
    %v421 = vsub.s32 0, %v420
    %v422 = vrot.slane %v417, %v421
    %v424 = vmul.f32 %v385, %v422
    %v425 = vmul.f32 %v386, %v422
    %v426 = vmul.f32 %v387, %v422
    %v427 = vmul.f32 %v388, %v422
    %v428 = vmul.f32 %v389, %v422
    %v429 = vmul.f32 %v390, %v422
    %v430 = vmul.f32 %v391, %v422
    %v431 = vmul.f32 %v392, %v422
    %v432 = vmul.f32 %v393, %v422
    %v433 = vmul.f32 %v394, %v422
    %v434 = vmul.f32 %v395, %v422
    %v435 = vmul.f32 %v396, %v422
    %v436 = vmul.f32 %v397, %v422
    %v437 = vmul.f32 %v398, %v422
    %v438 = vmul.f32 %v399, %v422
    %v439 = vmul.f32 %v400, %v422
    %v440 = vmul.f32 %v401, %v422
    %v441 = vmul.f32 %v402, %v422
    %v442 = vmul.f32 %v403, %v422
    %v443 = vmul.f32 %v404, %v422
    %v444 = vmul.f32 %v405, %v422
    %v445 = vmul.f32 %v406, %v422
    %v446 = vmul.f32 %v407, %v422
    %v447 = vmul.f32 %v408, %v422
    %v448 = vmul.f32 %v409, %v422
    %v449 = vmul.f32 %v410, %v422
    %v450 = vmul.f32 %v411, %v422
    %v451 = vmul.f32 %v412, %v422
    %v452 = vmul.f32 %v413, %v422
    %v453 = vmul.f32 %v414, %v422
    %v454 = vmul.f32 %v415, %v422
    %v455 = vmul.f32 %v416, %v422
    %v456 = vld [vmem:[%s2] sm:$0x1]
    %v458 = vlaneseq
    %v459 = vshrl.u32 %v458, 7
    %v460 = vsub.s32 0, %v459
    %v461 = vrot.slane %v456, %v460
    %v463 = vadd.f32 %v424, %v461
    %v464 = vadd.f32 %v425, %v461
    %v465 = vadd.f32 %v426, %v461
    %v466 = vadd.f32 %v427, %v461
    %v467 = vadd.f32 %v428, %v461
    %v468 = vadd.f32 %v429, %v461
    %v469 = vadd.f32 %v430, %v461
    %v470 = vadd.f32 %v431, %v461
    %v471 = vadd.f32 %v432, %v461
    %v472 = vadd.f32 %v433, %v461
    %v473 = vadd.f32 %v434, %v461
    %v474 = vadd.f32 %v435, %v461
    %v475 = vadd.f32 %v436, %v461
    %v476 = vadd.f32 %v437, %v461
    %v477 = vadd.f32 %v438, %v461
    %v478 = vadd.f32 %v439, %v461
    %v479 = vadd.f32 %v440, %v461
    %v480 = vadd.f32 %v441, %v461
    %v481 = vadd.f32 %v442, %v461
    %v482 = vadd.f32 %v443, %v461
    %v483 = vadd.f32 %v444, %v461
    %v484 = vadd.f32 %v445, %v461
    %v485 = vadd.f32 %v446, %v461
    %v486 = vadd.f32 %v447, %v461
    %v487 = vadd.f32 %v448, %v461
    %v488 = vadd.f32 %v449, %v461
    %v489 = vadd.f32 %v450, %v461
    %v490 = vadd.f32 %v451, %v461
    %v491 = vadd.f32 %v452, %v461
    %v492 = vadd.f32 %v453, %v461
    %v493 = vadd.f32 %v454, %v461
    %v494 = vadd.f32 %v455, %v461
    %v495 = vld [vmem:[%s3] sm:$0xff]
    %v496 = vld [vmem:[%s3 + $0x8] sm:$0xff]
    %v497 = vld [vmem:[%s3 + $0x10] sm:$0xff]
    %v498 = vld [vmem:[%s3 + $0x18] sm:$0xff]
    %v499 = vld [vmem:[%s3 + $0x20] sm:$0xff]
    %v500 = vld [vmem:[%s3 + $0x28] sm:$0xff]
    %v501 = vld [vmem:[%s3 + $0x30] sm:$0xff]
    %v502 = vld [vmem:[%s3 + $0x38] sm:$0xff]
    %v503 = vld [vmem:[%s3 + $0x40] sm:$0xff]
    %v504 = vld [vmem:[%s3 + $0x48] sm:$0xff]
    %v505 = vld [vmem:[%s3 + $0x50] sm:$0xff]
    %v506 = vld [vmem:[%s3 + $0x58] sm:$0xff]
    %v507 = vld [vmem:[%s3 + $0x60] sm:$0xff]
    %v508 = vld [vmem:[%s3 + $0x68] sm:$0xff]
    %v509 = vld [vmem:[%s3 + $0x70] sm:$0xff]
    %v510 = vld [vmem:[%s3 + $0x78] sm:$0xff]
    %511 = vxpose.xlu0.b32.start [1/16] %v495, 128
    %512 = vxpose.xlu0.b32.cont [2/16] %v496, 128
    %513 = vxpose.xlu0.b32.cont [3/16] %v497, 128
    %514 = vxpose.xlu0.b32.cont [4/16] %v498, 128
    %515 = vxpose.xlu0.b32.cont [5/16] %v499, 128
    %516 = vxpose.xlu0.b32.cont [6/16] %v500, 128
    %517 = vxpose.xlu0.b32.cont [7/16] %v501, 128
    %518 = vxpose.xlu0.b32.cont [8/16] %v502, 128
    %519 = vxpose.xlu0.b32.cont [9/16] %v503, 128
    %520 = vxpose.xlu0.b32.cont [10/16] %v504, 128
    %521 = vxpose.xlu0.b32.cont [11/16] %v505, 128
    %522 = vxpose.xlu0.b32.cont [12/16] %v506, 128
    %523 = vxpose.xlu0.b32.cont [13/16] %v507, 128
    %524 = vxpose.xlu0.b32.cont [14/16] %v508, 128
    %525 = vxpose.xlu0.b32.cont [15/16] %v509, 128
    %526 = vxpose.xlu0.b32.end [16/16] %v510, 128
    %v527 = vpop.trf.xlu0
    %v528 = vpop.trf.xlu0
    %v529 = vpop.trf.xlu0
    %v530 = vpop.trf.xlu0
    %v531 = vpop.trf.xlu0
    %v532 = vpop.trf.xlu0
    %v533 = vpop.trf.xlu0
    %v534 = vpop.trf.xlu0
    %v535 = vpop.trf.xlu0
    %v536 = vpop.trf.xlu0
    %v537 = vpop.trf.xlu0
    %v538 = vpop.trf.xlu0
    %v539 = vpop.trf.xlu0
    %v540 = vpop.trf.xlu0
    %v541 = vpop.trf.xlu0
    %v542 = vpop.trf.xlu0
    %543 = vmatprep.subr.mxu0 0.0
    %544 = vmatpush1.xpose.msra.mxu0 %v463
    %545 = vmatprep.subr.mxu0 0.0
    %546 = vmatpush1.xpose.msra.mxu0 %v464
    %547 = vmatprep.subr.mxu0 0.0
    %548 = vmatpush1.xpose.msra.mxu0 %v465
    %549 = vmatprep.subr.mxu0 0.0
    %550 = vmatpush1.xpose.msra.mxu0 %v466
    %551 = vmatprep.subr.mxu0 0.0
    %552 = vmatpush1.xpose.msra.mxu0 %v467
    %553 = vmatprep.subr.mxu0 0.0
    %554 = vmatpush1.xpose.msra.mxu0 %v468
    %555 = vmatprep.subr.mxu0 0.0
    %556 = vmatpush1.xpose.msra.mxu0 %v469
    %557 = vmatprep.subr.mxu0 0.0
    %558 = vmatpush1.xpose.msra.mxu0 %v470
    %559 = vmatprep.subr.mxu0 0.0
    %560 = vmatpush1.xpose.msra.mxu0 %v471
    %561 = vmatprep.subr.mxu0 0.0
    %562 = vmatpush1.xpose.msra.mxu0 %v472
    %563 = vmatprep.subr.mxu0 0.0
    %564 = vmatpush1.xpose.msra.mxu0 %v473
    %565 = vmatprep.subr.mxu0 0.0
    %566 = vmatpush1.xpose.msra.mxu0 %v474
    %567 = vmatprep.subr.mxu0 0.0
    %568 = vmatpush1.xpose.msra.mxu0 %v475
    %569 = vmatprep.subr.mxu0 0.0
    %570 = vmatpush1.xpose.msra.mxu0 %v476
    %571 = vmatprep.subr.mxu0 0.0
    %572 = vmatpush1.xpose.msra.mxu0 %v477
    %573 = vmatprep.subr.mxu0 0.0
    %574 = vmatpush1.xpose.msra.mxu0 %v478
    %575 = vmatprep.subr.mxu0 0.0
    %576 = vmatpush1.xpose.msra.mxu0 %v479
    %577 = vmatprep.subr.mxu0 0.0
    %578 = vmatpush1.xpose.msra.mxu0 %v480
    %579 = vmatprep.subr.mxu0 0.0
    %580 = vmatpush1.xpose.msra.mxu0 %v481
    %581 = vmatprep.subr.mxu0 0.0
    %582 = vmatpush1.xpose.msra.mxu0 %v482
    %583 = vmatprep.subr.mxu0 0.0
    %584 = vmatpush1.xpose.msra.mxu0 %v483
    %585 = vmatprep.subr.mxu0 0.0
    %586 = vmatpush1.xpose.msra.mxu0 %v484
    %587 = vmatprep.subr.mxu0 0.0
    %588 = vmatpush1.xpose.msra.mxu0 %v485
    %589 = vmatprep.subr.mxu0 0.0
    %590 = vmatpush1.xpose.msra.mxu0 %v486
    %591 = vmatprep.subr.mxu0 0.0
    %592 = vmatpush1.xpose.msra.mxu0 %v487
    %593 = vmatprep.subr.mxu0 0.0
    %594 = vmatpush1.xpose.msra.mxu0 %v488
    %595 = vmatprep.subr.mxu0 0.0
    %596 = vmatpush1.xpose.msra.mxu0 %v489
    %597 = vmatprep.subr.mxu0 0.0
    %598 = vmatpush1.xpose.msra.mxu0 %v490
    %599 = vmatprep.subr.mxu0 0.0
    %600 = vmatpush1.xpose.msra.mxu0 %v491
    %601 = vmatprep.subr.mxu0 0.0
    %602 = vmatpush1.xpose.msra.mxu0 %v492
    %603 = vmatprep.subr.mxu0 0.0
    %604 = vmatpush1.xpose.msra.mxu0 %v493
    %605 = vmatprep.subr.mxu0 0.0
    %606 = vmatpush1.xpose.msra.mxu0 %v494
    %607 = vmatprep.mubr.f32.mxu0 0.0
    %608 = vmatmul.mubr.f32.gmra.mrb[0].mxu0 %v527
    %v609 = vpop.f32.mrb[0].mxu0
    %v610 = vadd.f32 0.0, %v609
    %v611 = vpop.f32.mrb[0].mxu0
    %v612 = vadd.f32 0.0, %v611
    %613 = vdwg.mxu0
    %615 = vrot.lane.b32.xlu0 %v610, 112
    %v616 = vpop.permute.xlu0 %615
    %618 = vrot.lane.b32.xlu0 %v610, 96
    %v619 = vpop.permute.xlu0 %618
    %621 = vrot.lane.b32.xlu0 %v610, 80
    %v622 = vpop.permute.xlu0 %621
    %624 = vrot.lane.b32.xlu0 %v610, 64
    %v625 = vpop.permute.xlu0 %624
    %627 = vrot.lane.b32.xlu0 %v610, 48
    %v628 = vpop.permute.xlu0 %627
    %630 = vrot.lane.b32.xlu0 %v610, 32
    %v631 = vpop.permute.xlu0 %630
    %633 = vrot.lane.b32.xlu0 %v610, 16
    %v634 = vpop.permute.xlu0 %633
    %637 = vrot.lane.b32.xlu0 %v612, 112
    %v638 = vpop.permute.xlu0 %637
    %640 = vrot.lane.b32.xlu0 %v612, 96
    %v641 = vpop.permute.xlu0 %640
    %643 = vrot.lane.b32.xlu0 %v612, 80
    %v644 = vpop.permute.xlu0 %643
    %646 = vrot.lane.b32.xlu0 %v612, 64
    %v647 = vpop.permute.xlu0 %646
    %649 = vrot.lane.b32.xlu0 %v612, 48
    %v650 = vpop.permute.xlu0 %649
    %652 = vrot.lane.b32.xlu0 %v612, 32
    %v653 = vpop.permute.xlu0 %652
    %655 = vrot.lane.b32.xlu0 %v612, 16
    %v656 = vpop.permute.xlu0 %655
    %v658 = vcombine.low %v610, %v619
    %v660 = vunpack.c.l.s4 1983009808
    %v661 = vunpack.c.0.s8 %v660
    %v662 = vlaneseq
    %v663 = vshrl.u32 %v662, 7
    %v664 = vsub.s32 %v661, %v663
    %v665 = vrot.slane %v658, %v664
    %v666 = vcombine.low %v616, %v622
    %v668 = vunpack.c.l.s4 1983009808
    %v669 = vunpack.c.0.s8 %v668
    %v670 = vlaneseq
    %v671 = vshrl.u32 %v670, 7
    %v672 = vsub.s32 %v669, %v671
    %v673 = vrot.slane %v666, %v672
    %v674 = vcombine.low %v625, %v631
    %v676 = vunpack.c.l.s4 1983009808
    %v677 = vunpack.c.0.s8 %v676
    %v678 = vlaneseq
    %v679 = vshrl.u32 %v678, 7
    %v680 = vsub.s32 %v677, %v679
    %v681 = vrot.slane %v674, %v680
    %v682 = vcombine.low %v628, %v634
    %v684 = vunpack.c.l.s4 1983009808
    %v685 = vunpack.c.0.s8 %v684
    %v686 = vlaneseq
    %v687 = vshrl.u32 %v686, 7
    %v688 = vsub.s32 %v685, %v687
    %v689 = vrot.slane %v682, %v688
    %v690 = vcombine.low %v665, %v673
    %v691 = vcombine.high %v665, %v673
    %v693 = vunpack.c.l.s4 1934713408
    %v694 = vunpack.c.0.s8 %v693
    %v695 = vlaneseq
    %v696 = vshrl.u32 %v695, 7
    %v697 = vsub.s32 %v694, %v696
    %v698 = vrot.slane %v690, %v697
    %v700 = vunpack.c.l.s4 1934713408
    %v701 = vunpack.c.0.s8 %v700
    %v702 = vlaneseq
    %v703 = vshrl.u32 %v702, 7
    %v704 = vsub.s32 %v701, %v703
    %v705 = vrot.slane %v691, %v704
    %v706 = vcombine.low %v681, %v689
    %v707 = vcombine.high %v681, %v689
    %v709 = vunpack.c.l.s4 1934713408
    %v710 = vunpack.c.0.s8 %v709
    %v711 = vlaneseq
    %v712 = vshrl.u32 %v711, 7
    %v713 = vsub.s32 %v710, %v712
    %v714 = vrot.slane %v706, %v713
    %v716 = vunpack.c.l.s4 1934713408
    %v717 = vunpack.c.0.s8 %v716
    %v718 = vlaneseq
    %v719 = vshrl.u32 %v718, 7
    %v720 = vsub.s32 %v717, %v719
    %v721 = vrot.slane %v707, %v720
    %v722 = vcombine.low %v698, %v714
    %v723 = vcombine.high %v698, %v714
    %v724 = vcombine.low %v705, %v721
    %v725 = vcombine.high %v705, %v721
    %v726 = vcombine.low %v612, %v641
    %v728 = vunpack.c.l.s4 1983009808
    %v729 = vunpack.c.0.s8 %v728
    %v730 = vlaneseq
    %v731 = vshrl.u32 %v730, 7
    %v732 = vsub.s32 %v729, %v731
    %v733 = vrot.slane %v726, %v732
    %v734 = vcombine.low %v638, %v644
    %v736 = vunpack.c.l.s4 1983009808
    %v737 = vunpack.c.0.s8 %v736
    %v738 = vlaneseq
    %v739 = vshrl.u32 %v738, 7
    %v740 = vsub.s32 %v737, %v739
    %v741 = vrot.slane %v734, %v740
    %v742 = vcombine.low %v647, %v653
    %v744 = vunpack.c.l.s4 1983009808
    %v745 = vunpack.c.0.s8 %v744
    %v746 = vlaneseq
    %v747 = vshrl.u32 %v746, 7
    %v748 = vsub.s32 %v745, %v747
    %v749 = vrot.slane %v742, %v748
    %v750 = vcombine.low %v650, %v656
    %v752 = vunpack.c.l.s4 1983009808
    %v753 = vunpack.c.0.s8 %v752
    %v754 = vlaneseq
    %v755 = vshrl.u32 %v754, 7
    %v756 = vsub.s32 %v753, %v755
    %v757 = vrot.slane %v750, %v756
    %v758 = vcombine.low %v733, %v741
    %v759 = vcombine.high %v733, %v741
    %v761 = vunpack.c.l.s4 1934713408
    %v762 = vunpack.c.0.s8 %v761
    %v763 = vlaneseq
    %v764 = vshrl.u32 %v763, 7
    %v765 = vsub.s32 %v762, %v764
    %v766 = vrot.slane %v758, %v765
    %v768 = vunpack.c.l.s4 1934713408
    %v769 = vunpack.c.0.s8 %v768
    %v770 = vlaneseq
    %v771 = vshrl.u32 %v770, 7
    %v772 = vsub.s32 %v769, %v771
    %v773 = vrot.slane %v759, %v772
    %v774 = vcombine.low %v749, %v757
    %v775 = vcombine.high %v749, %v757
    %v777 = vunpack.c.l.s4 1934713408
    %v778 = vunpack.c.0.s8 %v777
    %v779 = vlaneseq
    %v780 = vshrl.u32 %v779, 7
    %v781 = vsub.s32 %v778, %v780
    %v782 = vrot.slane %v774, %v781
    %v784 = vunpack.c.l.s4 1934713408
    %v785 = vunpack.c.0.s8 %v784
    %v786 = vlaneseq
    %v787 = vshrl.u32 %v786, 7
    %v788 = vsub.s32 %v785, %v787
    %v789 = vrot.slane %v775, %v788
    %v790 = vcombine.low %v766, %v782
    %v791 = vcombine.high %v766, %v782
    %v792 = vcombine.low %v773, %v789
    %v793 = vcombine.high %v773, %v789
    %vm794 = vcmask 130048
    %795 = vst.msk [vmem:[#allocation5] sm:$0xff] %vm794, %v722
    %796 = vst.msk [vmem:[#allocation5 + $0x8] sm:$0xff] %vm794, %v790
    %797 = vst.msk [vmem:[#allocation5 + $0x10] sm:$0xff] %vm794, %v723
    %798 = vst.msk [vmem:[#allocation5 + $0x18] sm:$0xff] %vm794, %v791
    %799 = vst.msk [vmem:[#allocation5 + $0x20] sm:$0xff] %vm794, %v724
    %800 = vst.msk [vmem:[#allocation5 + $0x28] sm:$0xff] %vm794, %v792
    %801 = vst.msk [vmem:[#allocation5 + $0x30] sm:$0xff] %vm794, %v725
    %802 = vst.msk [vmem:[#allocation5 + $0x38] sm:$0xff] %vm794, %v793
    // Predicated region
    $region22: #{tpu_custom_call.1} parent=1 // pred_check
      _
    $region23: #{tpu_custom_call.1} parent=1 // pred_check_branch
      %804 = sbr.rel (0) target = $region25
    $region24: #{tpu_custom_call.1} parent=1 // pred_region
      %s806 = ssub.s32 1024, 1024
      %807 = vsyncadd [#allocation4], %s806
      %s808 = sshll.u32 [#allocation5], 4
      %s809 = int_to_ptr.vmem [resolvable:$true] %s808
      %814 = dma.vmem_to_hbm [thread:$0]  %s809, 1024, %s4, [#allocation4], 128, 128, 8
    $region25: #{tpu_custom_call.1} parent=1 // pred_fallthru
      _
    // Predicated region
    $region26: #{tpu_custom_call.1} parent=1 // pred_check
      _
    $region27: #{tpu_custom_call.1} parent=1 // pred_check_branch
      %816 = sbr.rel (0) target = $region29
    $region28: #{tpu_custom_call.1} parent=1 // pred_region
      %817 = dma.done [#allocation4], 1024
    $region29: #{tpu_custom_call.1} parent=1 // pred_fallthru
      _
    %818 = vsyncpa [#allocation3], 1
    %819 = vsyncpa [#allocation4], 1

</llo_original>
